<compile_context>
chip_gen: v6e
topology: v6e:2x2x1
jax: 0.10.0
libtpu: 0.0.40
codegen_flags: <defaults>
</compile_context>

<pallas_src>
import jax
import jax.numpy as jnp
from jax.experimental import pallas as pl
from jax.experimental.pallas import tpu as pltpu

LOG_2PI = 1.8378770664093453
_OUT_SUB, _OUT_LANE = 8, 128     # lane-dense per-batch output block


def _softplus(x):
    # numerically stable softplus that lowers cleanly in Mosaic
    return jnp.maximum(x, 0.0) + jnp.log1p(jnp.exp(-jnp.abs(x)))


def _seq_vae_kernel(
    beta_ref,                       # (1, 1) f32 in SMEM
    y_ref, eps_ref,                 # (1, T, Dy) / (1, T, Dx) — one batch per grid step
    w_enc_ref, b_enc_ref,           # fused encoder  (Dy, 2Dx) / (1, 2Dx)
    w_dp_ref, b_dp_ref,             # fused decoder | prior-layer1  (Dx, Dy+H) / (1, Dy+H)
    w2_ref, b2_ref,                 # prior layer 2  (H, Dx) / (1, Dx)
    lvp_ref, lvy_ref,               # prior / decoder log-variance rows (1, Dx) / (1, Dy)
    out_ref,                        # (1, 8, 128) per-batch partial ELBO (lane dense)
):
    _, T, Dy = y_ref.shape
    Dx = eps_ref.shape[-1]

    beta = beta_ref[0, 0]
    y2d = y_ref[0]                  # (T, Dy) — leading size-1 squeeze is free
    eps2d = eps_ref[0]              # (T, Dx)

    # ---------------- encoder: q(x | y) (fused mu‖var matmul) ----------------
    z_enc = jnp.dot(y2d, w_enc_ref[...], preferred_element_type=jnp.float32) + b_enc_ref[...]
    mu = z_enc[:, :Dx]
    var = _softplus(z_enc[:, Dx:]) + 1e-6
    x2 = mu + jnp.sqrt(var) * eps2d                 # reparameterized sample (T, Dx)

    # log q(x) flat-summed over (time, latent); LOG_2PI term hoisted to a scalar
    log_q = -0.5 * (T * Dx * LOG_2PI
                    + jnp.sum(jnp.log(var))
                    + jnp.sum(eps2d * eps2d))

    # ---------------- decoder + prior layer-1 (fused matmul over full slab) ----------------
    z_dp = jnp.dot(x2, w_dp_ref[...], preferred_element_type=jnp.float32) + b_dp_ref[...]
    y_hat = z_dp[:, :Dy]                            # (T, Dy)
    h = jnp.tanh(z_dp[:, Dy:])                      # (T, H)  (row T-1 is masked below)
    mu_p = jnp.dot(h, w2_ref[...], preferred_element_type=jnp.float32) + b2_ref[...]

    # ---------------- prior: p(x_{t+1} | x_t) ----------------
    var_p = _softplus(lvp_ref[...]) + 1e-6          # (1, Dx)
    # pl.reciprocal(..., approx=True) at production sizes (EUP slot); exact here
    inv_var_p = pl.reciprocal(var_p)
    logdet_p = jnp.sum(jnp.log(var_p))              # scalar, hoisted out of elementwise path
    x_next = pltpu.roll(x2, T - 1, 0)               # row t <- x[t+1] (XLU sublane rotate)
    diff_p = x_next - mu_p
    valid = jax.lax.broadcasted_iota(jnp.int32, (T, Dx), 0) < (T - 1)   # drop t == T-1
    quad_p = jnp.sum(jnp.where(valid, diff_p * diff_p * inv_var_p, 0.0))
    log_prior = -0.5 * ((T - 1) * (Dx * LOG_2PI + logdet_p) + quad_p)

    # ---------------- decoder likelihood: p(y | x) ----------------
    var_y = _softplus(lvy_ref[...]) + 1e-6          # (1, Dy)
    inv_var_y = pl.reciprocal(var_y)
    logdet_y = jnp.sum(jnp.log(var_y))
    diff_y = y2d - y_hat
    quad_y = jnp.sum(diff_y * diff_y * inv_var_y)
    log_like = -0.5 * (T * (Dy * LOG_2PI + logdet_y) + quad_y)

    # ---------------- per-batch ELBO partial ----------------
    elbo_b = log_like + beta * (log_prior - log_q)
    out_ref[...] = jnp.full(out_ref.shape, elbo_b, dtype=jnp.float32)


def seq_vae_neg_elbo(y, eps, params, beta=1.0):
    """Pallas-backed SeqVae.forward(y, beta) with deterministic noise eps."""
    (W_mu, b_mu, W_var, b_var, W1, b1, W2, b2, lvp, C, d, lvy) = params
    B, T, Dy = y.shape
    Dx = eps.shape[-1]
    f32 = jnp.float32

    # fuse small GEMM weights on the XLA side (cheap, done once)
    w_enc = jnp.concatenate([W_mu, W_var], axis=1)      # (Dy, 2*Dx)
    b_enc = jnp.concatenate([b_mu, b_var], axis=1)      # (1, 2*Dx)
    w_dp = jnp.concatenate([C, W1], axis=1)             # (Dx, Dy + H)
    b_dp = jnp.concatenate([d, b1], axis=1)             # (1, Dy + H)
    beta_arr = jnp.full((1, 1), beta, f32)              # runtime scalar -> SMEM

    def _full_spec(shp):
        return pl.BlockSpec(shp, lambda b: (0,) * len(shp))

    out = pl.pallas_call(
        _seq_vae_kernel,
        out_shape=jax.ShapeDtypeStruct((B, _OUT_SUB, _OUT_LANE), f32),
        grid=(B,),
        in_specs=[
            pl.BlockSpec(memory_space=pltpu.MemorySpace.SMEM),        # beta
            pl.BlockSpec((1, T, Dy), lambda b: (b, 0, 0)),            # y   (one batch)
            pl.BlockSpec((1, T, Dx), lambda b: (b, 0, 0)),            # eps (one batch)
            _full_spec(w_enc.shape), _full_spec(b_enc.shape),
            _full_spec(w_dp.shape), _full_spec(b_dp.shape),
            _full_spec(W2.shape), _full_spec(b2.shape),
            _full_spec(lvp.shape), _full_spec(lvy.shape),
        ],
        out_specs=pl.BlockSpec((1, _OUT_SUB, _OUT_LANE), lambda b: (b, 0, 0)),
        compiler_params=pltpu.CompilerParams(
            dimension_semantics=("parallel",)),
    )(beta_arr, y, eps, w_enc, b_enc, w_dp, b_dp, W2, b2, lvp, lvy)

    # tiny final reduction over the per-batch partials
    return -jnp.mean(out[:, 0, 0])


def seq_vae_neg_elbo_ref(y, eps, params, beta=1.0):
    """Pure-JAX reference (same math as the PyTorch module) for correctness check."""
    (W_mu, b_mu, W_var, b_var, W1, b1, W2, b2, lvp, C, d, lvy) = params
    Dx = eps.shape[-1]
    mu = y @ W_mu + b_mu[0]
    var = _softplus(y @ W_var + b_var[0]) + 1e-6
    x = mu + jnp.sqrt(var) * eps
    log_q = jnp.sum(-0.5 * (LOG_2PI + jnp.log(var) + eps * eps), axis=(-2, -1))
    h = jnp.tanh(x[:, :-1] @ W1 + b1[0])
    mu_p = h @ W2 + b2[0]
    var_p = _softplus(lvp) + 1e-6
    diff_p = x[:, 1:, :Dx] - mu_p
    log_prior = jnp.sum(-0.5 * (LOG_2PI + jnp.log(var_p) + diff_p * diff_p / var_p), axis=(-2, -1))
    y_hat = x @ C + d[0]
    var_y = _softplus(lvy) + 1e-6
    diff_y = y - y_hat
    log_like = jnp.sum(-0.5 * (LOG_2PI + jnp.log(var_y) + diff_y * diff_y / var_y), axis=(-2, -1))
    return -jnp.mean(log_like + beta * (log_prior - log_q))


if __name__ == "__main__":
    B, T, Dy, Dx, H = 2, 8, 16, 8, 32

    key = jax.random.PRNGKey(0)
    ks = jax.random.split(key, 16)

    # deterministic synthetic parameters (no checkpoint load)
    W_mu = 0.3 * jax.random.normal(ks[0], (Dy, Dx), jnp.float32)
    b_mu = 0.1 * jax.random.normal(ks[1], (1, Dx), jnp.float32)
    W_var = 0.3 * jax.random.normal(ks[2], (Dy, Dx), jnp.float32)
    b_var = 0.1 * jax.random.normal(ks[3], (1, Dx), jnp.float32)
    W1 = 0.3 * jax.random.normal(ks[4], (Dx, H), jnp.float32)
    b1 = 0.1 * jax.random.normal(ks[5], (1, H), jnp.float32)
    W2 = 0.3 * jax.random.normal(ks[6], (H, Dx), jnp.float32)
    b2 = 0.1 * jax.random.normal(ks[7], (1, Dx), jnp.float32)
    lvp = 0.1 * jax.random.normal(ks[8], (1, Dx), jnp.float32)
    C = 0.3 * jax.random.normal(ks[9], (Dx, Dy), jnp.float32)
    d = 0.1 * jax.random.normal(ks[10], (1, Dy), jnp.float32)
    lvy = 0.1 * jax.random.normal(ks[11], (1, Dy), jnp.float32)
    params = (W_mu, b_mu, W_var, b_var, W1, b1, W2, b2, lvp, C, d, lvy)

    # inputs: observations + deterministic reparameterization noise
    y = jax.random.normal(ks[12], (B, T, Dy), jnp.float32)
    eps = jax.random.normal(ks[13], (B, T, Dx), jnp.float32)

    for beta in (1.0, 0.5):      # beta is a runtime SMEM scalar — no recompile per value
        loss = jax.block_until_ready(seq_vae_neg_elbo(y, eps, params, beta=beta))
        loss_ref = jax.block_until_ready(seq_vae_neg_elbo_ref(y, eps, params, beta=beta))
        assert jnp.isfinite(loss), "non-finite loss"
        assert jnp.allclose(loss, loss_ref, rtol=1e-4, atol=1e-4), (beta, loss, loss_ref)

    print("KERNEL_OK")
</pallas_src>

<mosaic_0001>
module attributes {stable_mosaic.version = 11 : i64} {
  func.func @_seq_vae_kernel(%arg0: i32, %arg1: memref<1x1xf32, #tpu.memory_space<smem>>, %arg2: memref<1x8x16xf32, #tpu.memory_space<vmem>>, %arg3: memref<1x8x8xf32, #tpu.memory_space<vmem>>, %arg4: memref<16x16xf32, #tpu.memory_space<vmem>>, %arg5: memref<1x16xf32, #tpu.memory_space<vmem>>, %arg6: memref<8x48xf32, #tpu.memory_space<vmem>>, %arg7: memref<1x48xf32, #tpu.memory_space<vmem>>, %arg8: memref<32x8xf32, #tpu.memory_space<vmem>>, %arg9: memref<1x8xf32, #tpu.memory_space<vmem>>, %arg10: memref<1x8xf32, #tpu.memory_space<vmem>>, %arg11: memref<1x16xf32, #tpu.memory_space<vmem>>, %arg12: memref<1x8x128xf32, #tpu.memory_space<vmem>>) attributes {dimension_semantics = [#tpu.dimension_semantics<parallel>], iteration_bounds = array<i64: 2>, scalar_prefetch = 0 : i64, scratch_operands = 0 : i64, tpu.core_type = #tpu.core_type<tc>, window_params = [{transform_indices = @transform_0, window_bounds = array<i64: 1, 1>}, {transform_indices = @transform_1, window_bounds = array<i64: 1, 8, 16>}, {transform_indices = @transform_2, window_bounds = array<i64: 1, 8, 8>}, {pipeline_mode = #tpu.pipeline_mode<synchronous>, transform_indices = @transform_3, window_bounds = array<i64: 16, 16>}, {pipeline_mode = #tpu.pipeline_mode<synchronous>, transform_indices = @transform_4, window_bounds = array<i64: 1, 16>}, {pipeline_mode = #tpu.pipeline_mode<synchronous>, transform_indices = @transform_5, window_bounds = array<i64: 8, 48>}, {pipeline_mode = #tpu.pipeline_mode<synchronous>, transform_indices = @transform_6, window_bounds = array<i64: 1, 48>}, {pipeline_mode = #tpu.pipeline_mode<synchronous>, transform_indices = @transform_7, window_bounds = array<i64: 32, 8>}, {pipeline_mode = #tpu.pipeline_mode<synchronous>, transform_indices = @transform_8, window_bounds = array<i64: 1, 8>}, {pipeline_mode = #tpu.pipeline_mode<synchronous>, transform_indices = @transform_9, window_bounds = array<i64: 1, 8>}, {pipeline_mode = #tpu.pipeline_mode<synchronous>, transform_indices = @transform_10, window_bounds = array<i64: 1, 16>}, {transform_indices = @transform_11, window_bounds = array<i64: 1, 8, 128>}]} {
    %c0 = arith.constant 0 : index
    %c0_0 = arith.constant 0 : index
    %0 = memref.load %arg1[%c0, %c0_0] : memref<1x1xf32, #tpu.memory_space<smem>>
    %c0_1 = arith.constant 0 : index
    %c0_2 = arith.constant 0 : index
    %c0_3 = arith.constant 0 : index
    %1 = vector.load %arg2[%c0_1, %c0_2, %c0_3] : memref<1x8x16xf32, #tpu.memory_space<vmem>>, vector<1x8x16xf32>
    %2 = vector.shape_cast %1 : vector<1x8x16xf32> to vector<8x16xf32>
    %c0_4 = arith.constant 0 : index
    %c0_5 = arith.constant 0 : index
    %c0_6 = arith.constant 0 : index
    %3 = vector.load %arg3[%c0_4, %c0_5, %c0_6] : memref<1x8x8xf32, #tpu.memory_space<vmem>>, vector<1x8x8xf32>
    %4 = vector.shape_cast %3 : vector<1x8x8xf32> to vector<8x8xf32>
    %c0_7 = arith.constant 0 : index
    %c0_8 = arith.constant 0 : index
    %5 = vector.load %arg4[%c0_7, %c0_8] : memref<16x16xf32, #tpu.memory_space<vmem>>, vector<16x16xf32>
    %cst = arith.constant dense<0.000000e+00> : vector<8x16xf32>
    %6 = tpu.matmul %2, %5, %cst {dimension_numbers = #tpu.dot_dimension_numbers<[1], [0], [0], [1], [0, 0, 1, 1], [], []>} : vector<8x16xf32>, vector<16x16xf32>, vector<8x16xf32> -> vector<8x16xf32>
    %c0_9 = arith.constant 0 : index
    %c0_10 = arith.constant 0 : index
    %7 = vector.load %arg5[%c0_9, %c0_10] : memref<1x16xf32, #tpu.memory_space<vmem>>, vector<1x16xf32>
    %8 = vector.broadcast %7 : vector<1x16xf32> to vector<8x16xf32>
    %9 = arith.addf %6, %8 : vector<8x16xf32>
    %10 = vector.extract_strided_slice %9 {offsets = [0, 0], sizes = [8, 8], strides = [1, 1]} : vector<8x16xf32> to vector<8x8xf32>
    %11 = vector.extract_strided_slice %9 {offsets = [0, 8], sizes = [8, 8], strides = [1, 1]} : vector<8x16xf32> to vector<8x8xf32>
    %cst_11 = arith.constant 0.000000e+00 : f32
    %12 = vector.broadcast %cst_11 : f32 to vector<8x8xf32>
    %13 = arith.maximumf %11, %12 : vector<8x8xf32>
    %14 = math.absf %11 : vector<8x8xf32>
    %cst_12 = arith.constant 0.000000e+00 : f32
    %15 = vector.broadcast %cst_12 : f32 to vector<8x8xf32>
    %16 = arith.subf %15, %14 : vector<8x8xf32>
    %17 = math.exp %16 : vector<8x8xf32>
    %18 = math.log1p %17 : vector<8x8xf32>
    %19 = arith.addf %13, %18 : vector<8x8xf32>
    %cst_13 = arith.constant 9.99999997E-7 : f32
    %20 = vector.broadcast %cst_13 : f32 to vector<8x8xf32>
    %21 = arith.addf %19, %20 : vector<8x8xf32>
    %22 = math.sqrt %21 : vector<8x8xf32>
    %23 = arith.mulf %22, %4 : vector<8x8xf32>
    %24 = arith.addf %10, %23 : vector<8x8xf32>
    %25 = math.log %21 : vector<8x8xf32>
    %26 = vector.shape_cast %25 : vector<8x8xf32> to vector<1x8x8xf32>
    %cst_14 = arith.constant dense<0.000000e+00> : vector<1xf32>
    %27 = vector.multi_reduction <add>, %26, %cst_14 [1, 2] : vector<1x8x8xf32> to vector<1xf32>
    %28 = vector.shape_cast %27 : vector<1xf32> to vector<1x1x1xf32>
    %29 = vector.extract %28[0, 0, 0] : f32 from vector<1x1x1xf32>
    %cst_15 = arith.constant 117.62413 : f32
    %30 = arith.addf %cst_15, %29 : f32
    %31 = arith.mulf %4, %4 : vector<8x8xf32>
    %32 = vector.shape_cast %31 : vector<8x8xf32> to vector<1x8x8xf32>
    %cst_16 = arith.constant dense<0.000000e+00> : vector<1xf32>
    %33 = vector.multi_reduction <add>, %32, %cst_16 [1, 2] : vector<1x8x8xf32> to vector<1xf32>
    %34 = vector.shape_cast %33 : vector<1xf32> to vector<1x1x1xf32>
    %35 = vector.extract %34[0, 0, 0] : f32 from vector<1x1x1xf32>
    %36 = arith.addf %30, %35 : f32
    %cst_17 = arith.constant -5.000000e-01 : f32
    %37 = arith.mulf %cst_17, %36 : f32
    %c0_18 = arith.constant 0 : index
    %c0_19 = arith.constant 0 : index
    %38 = vector.load %arg6[%c0_18, %c0_19] : memref<8x48xf32, #tpu.memory_space<vmem>>, vector<8x48xf32>
    %cst_20 = arith.constant dense<0.000000e+00> : vector<8x48xf32>
    %39 = tpu.matmul %24, %38, %cst_20 {dimension_numbers = #tpu.dot_dimension_numbers<[1], [0], [0], [1], [0, 0, 1, 1], [], []>} : vector<8x8xf32>, vector<8x48xf32>, vector<8x48xf32> -> vector<8x48xf32>
    %c0_21 = arith.constant 0 : index
    %c0_22 = arith.constant 0 : index
    %40 = vector.load %arg7[%c0_21, %c0_22] : memref<1x48xf32, #tpu.memory_space<vmem>>, vector<1x48xf32>
    %41 = vector.broadcast %40 : vector<1x48xf32> to vector<8x48xf32>
    %42 = arith.addf %39, %41 : vector<8x48xf32>
    %43 = vector.extract_strided_slice %42 {offsets = [0, 0], sizes = [8, 16], strides = [1, 1]} : vector<8x48xf32> to vector<8x16xf32>
    %44 = vector.extract_strided_slice %42 {offsets = [0, 16], sizes = [8, 32], strides = [1, 1]} : vector<8x48xf32> to vector<8x32xf32>
    %45 = math.tanh %44 : vector<8x32xf32>
    %c0_23 = arith.constant 0 : index
    %c0_24 = arith.constant 0 : index
    %46 = vector.load %arg8[%c0_23, %c0_24] : memref<32x8xf32, #tpu.memory_space<vmem>>, vector<32x8xf32>
    %cst_25 = arith.constant dense<0.000000e+00> : vector<8x8xf32>
    %47 = tpu.matmul %45, %46, %cst_25 {dimension_numbers = #tpu.dot_dimension_numbers<[1], [0], [0], [1], [0, 0, 1, 1], [], []>} : vector<8x32xf32>, vector<32x8xf32>, vector<8x8xf32> -> vector<8x8xf32>
    %c0_26 = arith.constant 0 : index
    %c0_27 = arith.constant 0 : index
    %48 = vector.load %arg9[%c0_26, %c0_27] : memref<1x8xf32, #tpu.memory_space<vmem>>, vector<1x8xf32>
    %49 = vector.broadcast %48 : vector<1x8xf32> to vector<8x8xf32>
    %50 = arith.addf %47, %49 : vector<8x8xf32>
    %c0_28 = arith.constant 0 : index
    %c0_29 = arith.constant 0 : index
    %51 = vector.load %arg10[%c0_28, %c0_29] : memref<1x8xf32, #tpu.memory_space<vmem>>, vector<1x8xf32>
    %cst_30 = arith.constant 0.000000e+00 : f32
    %52 = vector.broadcast %cst_30 : f32 to vector<1x8xf32>
    %53 = arith.maximumf %51, %52 : vector<1x8xf32>
    %54 = math.absf %51 : vector<1x8xf32>
    %cst_31 = arith.constant 0.000000e+00 : f32
    %55 = vector.broadcast %cst_31 : f32 to vector<1x8xf32>
    %56 = arith.subf %55, %54 : vector<1x8xf32>
    %57 = math.exp %56 : vector<1x8xf32>
    %58 = math.log1p %57 : vector<1x8xf32>
    %59 = arith.addf %53, %58 : vector<1x8xf32>
    %cst_32 = arith.constant 9.99999997E-7 : f32
    %60 = vector.broadcast %cst_32 : f32 to vector<1x8xf32>
    %61 = arith.addf %59, %60 : vector<1x8xf32>
    %62 = tpu.reciprocal %61 : vector<1x8xf32> -> vector<1x8xf32>
    %63 = math.log %61 : vector<1x8xf32>
    %64 = vector.shape_cast %63 : vector<1x8xf32> to vector<1x1x8xf32>
    %cst_33 = arith.constant dense<0.000000e+00> : vector<1xf32>
    %65 = vector.multi_reduction <add>, %64, %cst_33 [1, 2] : vector<1x1x8xf32> to vector<1xf32>
    %66 = vector.shape_cast %65 : vector<1xf32> to vector<1x1x1xf32>
    %67 = vector.extract %66[0, 0, 0] : f32 from vector<1x1x1xf32>
    %c7_i32 = arith.constant 7 : i32
    %68 = tpu.dynamic_rotate %24 by %c7_i32 dim 0 : vector<8x8xf32>, i32 -> vector<8x8xf32>
    %69 = arith.subf %68, %50 : vector<8x8xf32>
    %70 = tpu.iota {dimensions = array<i32: 0>} : vector<8x8xi32>
    %c7_i32_34 = arith.constant 7 : i32
    %71 = vector.broadcast %c7_i32_34 : i32 to vector<8x8xi32>
    %72 = arith.cmpi slt, %70, %71 : vector<8x8xi32>
    %73 = arith.mulf %69, %69 : vector<8x8xf32>
    %74 = vector.broadcast %62 : vector<1x8xf32> to vector<8x8xf32>
    %75 = arith.mulf %73, %74 : vector<8x8xf32>
    %cst_35 = arith.constant 0.000000e+00 : f32
    %76 = vector.broadcast %cst_35 : f32 to vector<8x8xf32>
    %77 = arith.select %72, %75, %76 : vector<8x8xi1>, vector<8x8xf32>
    %78 = vector.shape_cast %77 : vector<8x8xf32> to vector<1x8x8xf32>
    %cst_36 = arith.constant dense<0.000000e+00> : vector<1xf32>
    %79 = vector.multi_reduction <add>, %78, %cst_36 [1, 2] : vector<1x8x8xf32> to vector<1xf32>
    %80 = vector.shape_cast %79 : vector<1xf32> to vector<1x1x1xf32>
    %81 = vector.extract %80[0, 0, 0] : f32 from vector<1x1x1xf32>
    %cst_37 = arith.constant 14.7030163 : f32
    %82 = arith.addf %cst_37, %67 : f32
    %cst_38 = arith.constant 7.000000e+00 : f32
    %83 = arith.mulf %cst_38, %82 : f32
    %84 = arith.addf %83, %81 : f32
    %cst_39 = arith.constant -5.000000e-01 : f32
    %85 = arith.mulf %cst_39, %84 : f32
    %c0_40 = arith.constant 0 : index
    %c0_41 = arith.constant 0 : index
    %86 = vector.load %arg11[%c0_40, %c0_41] : memref<1x16xf32, #tpu.memory_space<vmem>>, vector<1x16xf32>
    %cst_42 = arith.constant 0.000000e+00 : f32
    %87 = vector.broadcast %cst_42 : f32 to vector<1x16xf32>
    %88 = arith.maximumf %86, %87 : vector<1x16xf32>
    %89 = math.absf %86 : vector<1x16xf32>
    %cst_43 = arith.constant 0.000000e+00 : f32
    %90 = vector.broadcast %cst_43 : f32 to vector<1x16xf32>
    %91 = arith.subf %90, %89 : vector<1x16xf32>
    %92 = math.exp %91 : vector<1x16xf32>
    %93 = math.log1p %92 : vector<1x16xf32>
    %94 = arith.addf %88, %93 : vector<1x16xf32>
    %cst_44 = arith.constant 9.99999997E-7 : f32
    %95 = vector.broadcast %cst_44 : f32 to vector<1x16xf32>
    %96 = arith.addf %94, %95 : vector<1x16xf32>
    %97 = tpu.reciprocal %96 : vector<1x16xf32> -> vector<1x16xf32>
    %98 = math.log %96 : vector<1x16xf32>
    %99 = vector.shape_cast %98 : vector<1x16xf32> to vector<1x1x16xf32>
    %cst_45 = arith.constant dense<0.000000e+00> : vector<1xf32>
    %100 = vector.multi_reduction <add>, %99, %cst_45 [1, 2] : vector<1x1x16xf32> to vector<1xf32>
    %101 = vector.shape_cast %100 : vector<1xf32> to vector<1x1x1xf32>
    %102 = vector.extract %101[0, 0, 0] : f32 from vector<1x1x1xf32>
    %103 = arith.subf %2, %43 : vector<8x16xf32>
    %104 = arith.mulf %103, %103 : vector<8x16xf32>
    %105 = vector.broadcast %97 : vector<1x16xf32> to vector<8x16xf32>
    %106 = arith.mulf %104, %105 : vector<8x16xf32>
    %107 = vector.shape_cast %106 : vector<8x16xf32> to vector<1x8x16xf32>
    %cst_46 = arith.constant dense<0.000000e+00> : vector<1xf32>
    %108 = vector.multi_reduction <add>, %107, %cst_46 [1, 2] : vector<1x8x16xf32> to vector<1xf32>
    %109 = vector.shape_cast %108 : vector<1xf32> to vector<1x1x1xf32>
    %110 = vector.extract %109[0, 0, 0] : f32 from vector<1x1x1xf32>
    %cst_47 = arith.constant 29.4060326 : f32
    %111 = arith.addf %cst_47, %102 : f32
    %cst_48 = arith.constant 8.000000e+00 : f32
    %112 = arith.mulf %cst_48, %111 : f32
    %113 = arith.addf %112, %110 : f32
    %cst_49 = arith.constant -5.000000e-01 : f32
    %114 = arith.mulf %cst_49, %113 : f32
    %115 = arith.subf %85, %37 : f32
    %116 = arith.mulf %0, %115 : f32
    %117 = arith.addf %114, %116 : f32
    %118 = vector.broadcast %117 : f32 to vector<1x8x128xf32>
    %c0_50 = arith.constant 0 : index
    %c0_51 = arith.constant 0 : index
    %c0_52 = arith.constant 0 : index
    %119 = vector.load %arg12[%c0_50, %c0_51, %c0_52] : memref<1x8x128xf32, #tpu.memory_space<vmem>>, vector<1x8x128xf32>
    tpu.vector_store %arg12[%c0_50, %c0_51, %c0_52], %118 {strides = array<i32>} : memref<1x8x128xf32, #tpu.memory_space<vmem>>, vector<1x8x128xf32>,
    return
  }
  func.func @transform_0(%arg0: i32) -> (i32, i32) {
    %c0_i32 = arith.constant 0 : i32
    %c0_i32_0 = arith.constant 0 : i32
    %c0_i32_1 = arith.constant 0 : i32
    return %c0_i32, %c0_i32_0 : i32, i32
  }
  func.func @transform_1(%arg0: i32) -> (i32, i32, i32) {
    %c0_i32 = arith.constant 0 : i32
    %c0_i32_0 = arith.constant 0 : i32
    %c0_i32_1 = arith.constant 0 : i32
    return %arg0, %c0_i32, %c0_i32_0 : i32, i32, i32
  }
  func.func @transform_2(%arg0: i32) -> (i32, i32, i32) {
    %c0_i32 = arith.constant 0 : i32
    %c0_i32_0 = arith.constant 0 : i32
    %c0_i32_1 = arith.constant 0 : i32
    return %arg0, %c0_i32, %c0_i32_0 : i32, i32, i32
  }
  func.func @transform_3(%arg0: i32) -> (i32, i32) {
    %c0_i32 = arith.constant 0 : i32
    %c0_i32_0 = arith.constant 0 : i32
    %c0_i32_1 = arith.constant 0 : i32
    return %c0_i32, %c0_i32_0 : i32, i32
  }
  func.func @transform_4(%arg0: i32) -> (i32, i32) {
    %c0_i32 = arith.constant 0 : i32
    %c0_i32_0 = arith.constant 0 : i32
    %c0_i32_1 = arith.constant 0 : i32
    return %c0_i32, %c0_i32_0 : i32, i32
  }
  func.func @transform_5(%arg0: i32) -> (i32, i32) {
    %c0_i32 = arith.constant 0 : i32
    %c0_i32_0 = arith.constant 0 : i32
    %c0_i32_1 = arith.constant 0 : i32
    return %c0_i32, %c0_i32_0 : i32, i32
  }
  func.func @transform_6(%arg0: i32) -> (i32, i32) {
    %c0_i32 = arith.constant 0 : i32
    %c0_i32_0 = arith.constant 0 : i32
    %c0_i32_1 = arith.constant 0 : i32
    return %c0_i32, %c0_i32_0 : i32, i32
  }
  func.func @transform_7(%arg0: i32) -> (i32, i32) {
    %c0_i32 = arith.constant 0 : i32
    %c0_i32_0 = arith.constant 0 : i32
    %c0_i32_1 = arith.constant 0 : i32
    return %c0_i32, %c0_i32_0 : i32, i32
  }
  func.func @transform_8(%arg0: i32) -> (i32, i32) {
    %c0_i32 = arith.constant 0 : i32
    %c0_i32_0 = arith.constant 0 : i32
    %c0_i32_1 = arith.constant 0 : i32
    return %c0_i32, %c0_i32_0 : i32, i32
  }
  func.func @transform_9(%arg0: i32) -> (i32, i32) {
    %c0_i32 = arith.constant 0 : i32
    %c0_i32_0 = arith.constant 0 : i32
    %c0_i32_1 = arith.constant 0 : i32
    return %c0_i32, %c0_i32_0 : i32, i32
  }
  func.func @transform_10(%arg0: i32) -> (i32, i32) {
    %c0_i32 = arith.constant 0 : i32
    %c0_i32_0 = arith.constant 0 : i32
    %c0_i32_1 = arith.constant 0 : i32
    return %c0_i32, %c0_i32_0 : i32, i32
  }
  func.func @transform_11(%arg0: i32) -> (i32, i32, i32) {
    %c0_i32 = arith.constant 0 : i32
    %c0_i32_0 = arith.constant 0 : i32
    %c0_i32_1 = arith.constant 0 : i32
    return %arg0, %c0_i32, %c0_i32_0 : i32, i32, i32
  }
}

</mosaic_0001>

<llo_original>
// kernel: tpu_custom_call.1
$region0: #{tpu_custom_call.1}
  #allocation0 [shape = 'u32[]', space=smem, size = 0x4, offset = 0x4, fixed_abs, tag = 'smem constant byte address 0x4 - core index']
  #allocation1 [shape = 'u32[144,128]{1,0:T(1,128)}', space=vmem, size = 0x12000, scoped, tag = 'internal scratch']
  #allocation2 [shape = 'f32[1,1]{1,0:T(1,128)S(6)}', space=smem, size = 0x200, scoped, tag = 'scoped memory for tpu_custom_call.1']
  %s0 = inlined_call_operand.<no memory space> [shape: f32[1,1], index: 0, kind: input, shape index: {}]
  %s1 = inlined_call_operand.vmem [shape: f32[2,8,16], index: 1, kind: input, shape index: {}]
  %s2 = inlined_call_operand.vmem [shape: f32[2,8,8], index: 2, kind: input, shape index: {}]
  %s3 = inlined_call_operand.hbm [shape: f32[16,16], index: 3, kind: input, shape index: {}]
  %s4 = inlined_call_operand.vmem [shape: f32[1,16], index: 4, kind: input, shape index: {}]
  %s5 = inlined_call_operand.vmem [shape: f32[8,48], index: 5, kind: input, shape index: {}]
  %s6 = inlined_call_operand.vmem [shape: f32[1,48], index: 6, kind: input, shape index: {}]
  %s7 = inlined_call_operand.vmem [shape: f32[32,8], index: 7, kind: input, shape index: {}]
  %s8 = inlined_call_operand.vmem [shape: f32[1,8], index: 8, kind: input, shape index: {}]
  %s9 = inlined_call_operand.vmem [shape: f32[1,8], index: 9, kind: input, shape index: {}]
  %s10 = inlined_call_operand.vmem [shape: f32[1,16], index: 10, kind: input, shape index: {}]
  %s11 = inlined_call_operand.hbm [shape: f32[2,8,128], index: 11, kind: output, shape index: {}]
  %s12 = sld [smem:[#allocation0]]
  $region81: #{tpu_custom_call.1} parent=0
    _
  %s14 = ssub.s32 1, %s12
  %s15 = scalar_select 0, %s14, %s12
  %16 = sst [smem:[#allocation2]] %s0
  $region1: #{tpu_custom_call.1} parent=0
    #allocation3 [shape = 'u8[8192]{0}', space=vmem, size = 0x2000, scoped, tag = 'input window, operand 3, single buffered']
    #allocation4 [shape = 's32[2]{0}', space=sflag, size = 0x8, scoped, tag = 'scoped memory for tpu_custom_call.1']
    #allocation5 [shape = 's32[2]{0}', space=sflag, size = 0x8, scoped, tag = 'scoped memory for tpu_custom_call.1']
    #allocation6 [shape = 'u8[8192]{0}', space=vmem, size = 0x2000, scoped, tag = 'output window, operand 0']
    %17 = vsyncpa [#allocation4], 0
    %18 = vsyncpa [#allocation5], 0
    %s19 = scalar_lea.sflag [#allocation5], 1
    %20 = vsyncpa %s19, 0
    loop: start=0, step=1, limit=4
    $region2: #{tpu_custom_call.1} parent=1 // loop_pre_header
      _
    $region3: #{tpu_custom_call.1} parent=1 // loop_header
      %s22 = sphi 0, %s26
      %p23 = scmp.ge.s32.totalorder %s22, 4
      %s30 = sphi 0, %s30
      %s32 = sphi 0, %s30
      %s33 = sphi 0, %s32
      %s47 = sphi 0, %s33
      %s53 = sphi 0, %s55
      %s56 = sphi 0, %s53
      %s57 = sphi 0, %s56
      %s73 = sphi 0, %s57
      %s79 = sphi 0, %s81
      %s82 = sphi 0, %s79
      %s83 = sphi 0, %s82
      %s99 = sphi 0, %s83
      %s103 = sphi 0, %s103
      %s105 = sphi 0, %s103
      %s106 = sphi 0, %s105
      %s120 = sphi 0, %s106
      %s124 = sphi 0, %s124
      %s126 = sphi 0, %s124
      %s127 = sphi 0, %s126
      %s141 = sphi 0, %s127
      %s145 = sphi 0, %s145
      %s147 = sphi 0, %s145
      %s148 = sphi 0, %s147
      %s162 = sphi 0, %s148
      %s166 = sphi 0, %s166
      %s168 = sphi 0, %s166
      %s169 = sphi 0, %s168
      %s183 = sphi 0, %s169
      %s187 = sphi 0, %s187
      %s189 = sphi 0, %s187
      %s190 = sphi 0, %s189
      %s204 = sphi 0, %s190
      %s208 = sphi 0, %s208
      %s210 = sphi 0, %s208
      %s211 = sphi 0, %s210
      %s225 = sphi 0, %s211
      %s229 = sphi 0, %s229
      %s231 = sphi 0, %s229
      %s232 = sphi 0, %s231
      %s246 = sphi 0, %s232
      %s250 = sphi 0, %s250
      %s252 = sphi 0, %s250
      %s253 = sphi 0, %s252
      %s267 = sphi 0, %s253
      %s273 = sphi 0, %s275
      %s276 = sphi 0, %s273
      %s277 = sphi 0, %s276
      %s293 = sphi 0, %s277
    $region4: #{tpu_custom_call.1} parent=1 // loop_header_branch
      %25 = sbr.rel (%p23) target = $region8
    $region5: #{tpu_custom_call.1} parent=1 // loop_body
      %s27 = ssub.s32 %s22, 1
      %s28 = ssub.s32 %s22, 2
      %s29 = sadd.s32 %s22, 1
      %s31 = sadd.s32 %s30, 1
      %p34 = scmp.eq.s32.totalorder %s22, 1
      %p35 = scmp.ne.s32.totalorder %s30, %s32
      %p36 = scmp.eq.s32.totalorder %s22, 0
      %p37 = por %p35, %p36
      %p38 = scmp.ne.s32.totalorder %s30, %s32
      %p39 = scmp.eq.s32.totalorder %s27, 1
      %p40 = por %p38, %p39
      %p41 = scmp.ne.s32.totalorder %s32, %s33
      %p42 = scmp.eq.s32.totalorder %s27, 0
      %p43 = por %p41, %p42
      %p44 = scmp.ne.s32.totalorder %s32, %s33
      %p45 = scmp.eq.s32.totalorder %s28, 1
      %p46 = por %p44, %p45
      %p48 = scmp.ne.s32.totalorder %s33, %s47
      %p49 = scmp.eq.s32.totalorder %s28, 0
      %p50 = por %p48, %p49
      %s51 = ssub.s32 %s22, %s29
      %p52 = scmp.eq.s32.totalorder %s51, 0
      %s54 = sadd.s32 %s53, 1
      %s55 = scalar_select %p52, %s53, %s54
      %p58 = pneg %p52
      %p59 = scmp.eq.s32.totalorder %s22, 1
      %p60 = por %p58, %p59
      %p61 = scmp.ne.s32.totalorder %s53, %s56
      %p62 = scmp.eq.s32.totalorder %s22, 0
      %p63 = por %p61, %p62
      %p64 = scmp.ne.s32.totalorder %s53, %s56
      %p65 = scmp.eq.s32.totalorder %s27, 1
      %p66 = por %p64, %p65
      %p67 = scmp.ne.s32.totalorder %s56, %s57
      %p68 = scmp.eq.s32.totalorder %s27, 0
      %p69 = por %p67, %p68
      %p70 = scmp.ne.s32.totalorder %s56, %s57
      %p71 = scmp.eq.s32.totalorder %s28, 1
      %p72 = por %p70, %p71
      %p74 = scmp.ne.s32.totalorder %s57, %s73
      %p75 = scmp.eq.s32.totalorder %s28, 0
      %p76 = por %p74, %p75
      %s77 = ssub.s32 %s22, %s29
      %p78 = scmp.eq.s32.totalorder %s77, 0
      %s80 = sadd.s32 %s79, 1
      %s81 = scalar_select %p78, %s79, %s80
      %p84 = pneg %p78
      %p85 = scmp.eq.s32.totalorder %s22, 1
      %p86 = por %p84, %p85
      %p87 = scmp.ne.s32.totalorder %s79, %s82
      %p88 = scmp.eq.s32.totalorder %s22, 0
      %p89 = por %p87, %p88
      %p90 = scmp.ne.s32.totalorder %s79, %s82
      %p91 = scmp.eq.s32.totalorder %s27, 1
      %p92 = por %p90, %p91
      %p93 = scmp.ne.s32.totalorder %s82, %s83
      %p94 = scmp.eq.s32.totalorder %s27, 0
      %p95 = por %p93, %p94
      %p96 = scmp.ne.s32.totalorder %s82, %s83
      %p97 = scmp.eq.s32.totalorder %s28, 1
      %p98 = por %p96, %p97
      %p100 = scmp.ne.s32.totalorder %s83, %s99
      %p101 = scmp.eq.s32.totalorder %s28, 0
      %p102 = por %p100, %p101
      %s104 = sadd.s32 %s103, 1
      %p107 = scmp.eq.s32.totalorder %s22, 1
      %p108 = scmp.ne.s32.totalorder %s103, %s105
      %p109 = scmp.eq.s32.totalorder %s22, 0
      %p110 = por %p108, %p109
      %p111 = scmp.ne.s32.totalorder %s103, %s105
      %p112 = scmp.eq.s32.totalorder %s27, 1
      %p113 = por %p111, %p112
      %p114 = scmp.ne.s32.totalorder %s105, %s106
      %p115 = scmp.eq.s32.totalorder %s27, 0
      %p116 = por %p114, %p115
      %p117 = scmp.ne.s32.totalorder %s105, %s106
      %p118 = scmp.eq.s32.totalorder %s28, 1
      %p119 = por %p117, %p118
      %p121 = scmp.ne.s32.totalorder %s106, %s120
      %p122 = scmp.eq.s32.totalorder %s28, 0
      %p123 = por %p121, %p122
      %s125 = sadd.s32 %s124, 1
      %p128 = scmp.eq.s32.totalorder %s22, 1
      %p129 = scmp.ne.s32.totalorder %s124, %s126
      %p130 = scmp.eq.s32.totalorder %s22, 0
      %p131 = por %p129, %p130
      %p132 = scmp.ne.s32.totalorder %s124, %s126
      %p133 = scmp.eq.s32.totalorder %s27, 1
      %p134 = por %p132, %p133
      %p135 = scmp.ne.s32.totalorder %s126, %s127
      %p136 = scmp.eq.s32.totalorder %s27, 0
      %p137 = por %p135, %p136
      %p138 = scmp.ne.s32.totalorder %s126, %s127
      %p139 = scmp.eq.s32.totalorder %s28, 1
      %p140 = por %p138, %p139
      %p142 = scmp.ne.s32.totalorder %s127, %s141
      %p143 = scmp.eq.s32.totalorder %s28, 0
      %p144 = por %p142, %p143
      %s146 = sadd.s32 %s145, 1
      %p149 = scmp.eq.s32.totalorder %s22, 1
      %p150 = scmp.ne.s32.totalorder %s145, %s147
      %p151 = scmp.eq.s32.totalorder %s22, 0
      %p152 = por %p150, %p151
      %p153 = scmp.ne.s32.totalorder %s145, %s147
      %p154 = scmp.eq.s32.totalorder %s27, 1
      %p155 = por %p153, %p154
      %p156 = scmp.ne.s32.totalorder %s147, %s148
      %p157 = scmp.eq.s32.totalorder %s27, 0
      %p158 = por %p156, %p157
      %p159 = scmp.ne.s32.totalorder %s147, %s148
      %p160 = scmp.eq.s32.totalorder %s28, 1
      %p161 = por %p159, %p160
      %p163 = scmp.ne.s32.totalorder %s148, %s162
      %p164 = scmp.eq.s32.totalorder %s28, 0
      %p165 = por %p163, %p164
      %s167 = sadd.s32 %s166, 1
      %p170 = scmp.eq.s32.totalorder %s22, 1
      %p171 = scmp.ne.s32.totalorder %s166, %s168
      %p172 = scmp.eq.s32.totalorder %s22, 0
      %p173 = por %p171, %p172
      %p174 = scmp.ne.s32.totalorder %s166, %s168
      %p175 = scmp.eq.s32.totalorder %s27, 1
      %p176 = por %p174, %p175
      %p177 = scmp.ne.s32.totalorder %s168, %s169
      %p178 = scmp.eq.s32.totalorder %s27, 0
      %p179 = por %p177, %p178
      %p180 = scmp.ne.s32.totalorder %s168, %s169
      %p181 = scmp.eq.s32.totalorder %s28, 1
      %p182 = por %p180, %p181
      %p184 = scmp.ne.s32.totalorder %s169, %s183
      %p185 = scmp.eq.s32.totalorder %s28, 0
      %p186 = por %p184, %p185
      %s188 = sadd.s32 %s187, 1
      %p191 = scmp.eq.s32.totalorder %s22, 1
      %p192 = scmp.ne.s32.totalorder %s187, %s189
      %p193 = scmp.eq.s32.totalorder %s22, 0
      %p194 = por %p192, %p193
      %p195 = scmp.ne.s32.totalorder %s187, %s189
      %p196 = scmp.eq.s32.totalorder %s27, 1
      %p197 = por %p195, %p196
      %p198 = scmp.ne.s32.totalorder %s189, %s190
      %p199 = scmp.eq.s32.totalorder %s27, 0
      %p200 = por %p198, %p199
      %p201 = scmp.ne.s32.totalorder %s189, %s190
      %p202 = scmp.eq.s32.totalorder %s28, 1
      %p203 = por %p201, %p202
      %p205 = scmp.ne.s32.totalorder %s190, %s204
      %p206 = scmp.eq.s32.totalorder %s28, 0
      %p207 = por %p205, %p206
      %s209 = sadd.s32 %s208, 1
      %p212 = scmp.eq.s32.totalorder %s22, 1
      %p213 = scmp.ne.s32.totalorder %s208, %s210
      %p214 = scmp.eq.s32.totalorder %s22, 0
      %p215 = por %p213, %p214
      %p216 = scmp.ne.s32.totalorder %s208, %s210
      %p217 = scmp.eq.s32.totalorder %s27, 1
      %p218 = por %p216, %p217
      %p219 = scmp.ne.s32.totalorder %s210, %s211
      %p220 = scmp.eq.s32.totalorder %s27, 0
      %p221 = por %p219, %p220
      %p222 = scmp.ne.s32.totalorder %s210, %s211
      %p223 = scmp.eq.s32.totalorder %s28, 1
      %p224 = por %p222, %p223
      %p226 = scmp.ne.s32.totalorder %s211, %s225
      %p227 = scmp.eq.s32.totalorder %s28, 0
      %p228 = por %p226, %p227
      %s230 = sadd.s32 %s229, 1
      %p233 = scmp.eq.s32.totalorder %s22, 1
      %p234 = scmp.ne.s32.totalorder %s229, %s231
      %p235 = scmp.eq.s32.totalorder %s22, 0
      %p236 = por %p234, %p235
      %p237 = scmp.ne.s32.totalorder %s229, %s231
      %p238 = scmp.eq.s32.totalorder %s27, 1
      %p239 = por %p237, %p238
      %p240 = scmp.ne.s32.totalorder %s231, %s232
      %p241 = scmp.eq.s32.totalorder %s27, 0
      %p242 = por %p240, %p241
      %p243 = scmp.ne.s32.totalorder %s231, %s232
      %p244 = scmp.eq.s32.totalorder %s28, 1
      %p245 = por %p243, %p244
      %p247 = scmp.ne.s32.totalorder %s232, %s246
      %p248 = scmp.eq.s32.totalorder %s28, 0
      %p249 = por %p247, %p248
      %s251 = sadd.s32 %s250, 1
      %p254 = scmp.eq.s32.totalorder %s22, 1
      %p255 = scmp.ne.s32.totalorder %s250, %s252
      %p256 = scmp.eq.s32.totalorder %s22, 0
      %p257 = por %p255, %p256
      %p258 = scmp.ne.s32.totalorder %s250, %s252
      %p259 = scmp.eq.s32.totalorder %s27, 1
      %p260 = por %p258, %p259
      %p261 = scmp.ne.s32.totalorder %s252, %s253
      %p262 = scmp.eq.s32.totalorder %s27, 0
      %p263 = por %p261, %p262
      %p264 = scmp.ne.s32.totalorder %s252, %s253
      %p265 = scmp.eq.s32.totalorder %s28, 1
      %p266 = por %p264, %p265
      %p268 = scmp.ne.s32.totalorder %s253, %s267
      %p269 = scmp.eq.s32.totalorder %s28, 0
      %p270 = por %p268, %p269
      %s271 = ssub.s32 %s22, %s29
      %p272 = scmp.eq.s32.totalorder %s271, 0
      %s274 = sadd.s32 %s273, 1
      %s275 = scalar_select %p272, %s273, %s274
      %p278 = pneg %p272
      %p279 = scmp.eq.s32.totalorder %s22, 1
      %p280 = por %p278, %p279
      %p281 = scmp.ne.s32.totalorder %s273, %s276
      %p282 = scmp.eq.s32.totalorder %s22, 0
      %p283 = por %p281, %p282
      %p284 = scmp.ne.s32.totalorder %s273, %s276
      %p285 = scmp.eq.s32.totalorder %s27, 1
      %p286 = por %p284, %p285
      %p287 = scmp.ne.s32.totalorder %s276, %s277
      %p288 = scmp.eq.s32.totalorder %s27, 0
      %p289 = por %p287, %p288
      %p290 = scmp.ne.s32.totalorder %s276, %s277
      %p291 = scmp.eq.s32.totalorder %s28, 1
      %p292 = por %p290, %p291
      %p294 = scmp.ne.s32.totalorder %s277, %s293
      %p295 = scmp.eq.s32.totalorder %s28, 0
      %p296 = por %p294, %p295
      %p297 = scmp.le.s32.totalorder 1, %s22
      %p298 = scmp.lt.s32.totalorder %s22, 3
      %p299 = pnand %p297, %p298
      %p300 = pneg %p299
      // Predicated region
      $region9: #{tpu_custom_call.1} parent=5 // pred_check
        _
      $region10: #{tpu_custom_call.1} parent=5 // pred_check_branch
        %302 = sbr.rel (%p299) target = $region12
      $region11: #{tpu_custom_call.1} parent=5 // pred_region
        %s303 = ssub.s32 %s22, 1
        // Predicated region
        $region13: #{tpu_custom_call.1} parent=11 // pred_check
          %p304 = pneg %p43
        $region14: #{tpu_custom_call.1} parent=11 // pred_check_branch
          %306 = sbr.rel (%p304) target = $region16
        $region15: #{tpu_custom_call.1} parent=11 // pred_region
          _
        $region16: #{tpu_custom_call.1} parent=11 // pred_fallthru
          _
        // Predicated region
        $region17: #{tpu_custom_call.1} parent=11 // pred_check
          %p307 = pneg %p116
        $region18: #{tpu_custom_call.1} parent=11 // pred_check_branch
          %309 = sbr.rel (%p307) target = $region20
        $region19: #{tpu_custom_call.1} parent=11 // pred_region
          %s311 = ssub.s32 256, 256
          %312 = vsyncadd [#allocation4], %s311
          %s313 = sshll.u32 [#allocation3], 4
          %s314 = int_to_ptr.vmem [resolvable:$true] %s313
          %319 = dma.hbm_to_vmem [thread:$0]  %s3, 256, %s314, [#allocation4], 128, 128, 8
        $region20: #{tpu_custom_call.1} parent=11 // pred_fallthru
          _
        // Predicated region
        $region21: #{tpu_custom_call.1} parent=11 // pred_check
          %p320 = pneg %p137
        $region22: #{tpu_custom_call.1} parent=11 // pred_check_branch
          %322 = sbr.rel (%p320) target = $region24
        $region23: #{tpu_custom_call.1} parent=11 // pred_region
          _
        $region24: #{tpu_custom_call.1} parent=11 // pred_fallthru
          _
        // Predicated region
        $region25: #{tpu_custom_call.1} parent=11 // pred_check
          %p323 = pneg %p158
        $region26: #{tpu_custom_call.1} parent=11 // pred_check_branch
          %325 = sbr.rel (%p323) target = $region28
        $region27: #{tpu_custom_call.1} parent=11 // pred_region
          _
        $region28: #{tpu_custom_call.1} parent=11 // pred_fallthru
          _
        // Predicated region
        $region29: #{tpu_custom_call.1} parent=11 // pred_check
          %p326 = pneg %p179
        $region30: #{tpu_custom_call.1} parent=11 // pred_check_branch
          %328 = sbr.rel (%p326) target = $region32
        $region31: #{tpu_custom_call.1} parent=11 // pred_region
          _
        $region32: #{tpu_custom_call.1} parent=11 // pred_fallthru
          _
        // Predicated region
        $region33: #{tpu_custom_call.1} parent=11 // pred_check
          %p329 = pneg %p200
        $region34: #{tpu_custom_call.1} parent=11 // pred_check_branch
          %331 = sbr.rel (%p329) target = $region36
        $region35: #{tpu_custom_call.1} parent=11 // pred_region
          _
        $region36: #{tpu_custom_call.1} parent=11 // pred_fallthru
          _
        // Predicated region
        $region37: #{tpu_custom_call.1} parent=11 // pred_check
          %p332 = pneg %p221
        $region38: #{tpu_custom_call.1} parent=11 // pred_check_branch
          %334 = sbr.rel (%p332) target = $region40
        $region39: #{tpu_custom_call.1} parent=11 // pred_region
          _
        $region40: #{tpu_custom_call.1} parent=11 // pred_fallthru
          _
        // Predicated region
        $region41: #{tpu_custom_call.1} parent=11 // pred_check
          %p335 = pneg %p242
        $region42: #{tpu_custom_call.1} parent=11 // pred_check_branch
          %337 = sbr.rel (%p335) target = $region44
        $region43: #{tpu_custom_call.1} parent=11 // pred_region
          _
        $region44: #{tpu_custom_call.1} parent=11 // pred_fallthru
          _
        // Predicated region
        $region45: #{tpu_custom_call.1} parent=11 // pred_check
          %p338 = pneg %p263
        $region46: #{tpu_custom_call.1} parent=11 // pred_check_branch
          %340 = sbr.rel (%p338) target = $region48
        $region47: #{tpu_custom_call.1} parent=11 // pred_region
          _
        $region48: #{tpu_custom_call.1} parent=11 // pred_fallthru
          _
      $region12: #{tpu_custom_call.1} parent=5 // pred_fallthru
        _
      %p341 = scmp.lt.s32.totalorder %s22, 2
      // Predicated region
      $region49: #{tpu_custom_call.1} parent=5 // pred_check
        %p342 = pneg %p341
      $region50: #{tpu_custom_call.1} parent=5 // pred_check_branch
        %344 = sbr.rel (%p342) target = $region52
      $region51: #{tpu_custom_call.1} parent=5 // pred_region
        // Predicated region
        $region53: #{tpu_custom_call.1} parent=51 // pred_check
          %p345 = pneg %p63
        $region54: #{tpu_custom_call.1} parent=51 // pred_check_branch
          %347 = sbr.rel (%p345) target = $region56
        $region55: #{tpu_custom_call.1} parent=51 // pred_region
          %p348 = scmp.lt.s32.totalorder %s22, 1
          %s349 = scalar_select %p348, %s22, 1
          %s350 = smul.addr %s349, 8
          %s351 = scalar_lea.vmem %s1, %s350
        $region56: #{tpu_custom_call.1} parent=51 // pred_fallthru
          _
        // Predicated region
        $region57: #{tpu_custom_call.1} parent=51 // pred_check
          %p352 = pneg %p89
        $region58: #{tpu_custom_call.1} parent=51 // pred_check_branch
          %354 = sbr.rel (%p352) target = $region60
        $region59: #{tpu_custom_call.1} parent=51 // pred_region
          %p355 = scmp.lt.s32.totalorder %s22, 1
          %s356 = scalar_select %p355, %s22, 1
          %s357 = smul.addr %s356, 8
          %s358 = scalar_lea.vmem %s2, %s357
        $region60: #{tpu_custom_call.1} parent=51 // pred_fallthru
          _
      $region52: #{tpu_custom_call.1} parent=5 // pred_fallthru
        _
      %p359 = scmp.le.s32.totalorder 1, %s22
      %p360 = scmp.lt.s32.totalorder %s22, 3
      %p361 = pnand %p359, %p360
      %p362 = pneg %p361
      // Predicated region
      $region61: #{tpu_custom_call.1} parent=5 // pred_check
        _
      $region62: #{tpu_custom_call.1} parent=5 // pred_check_branch
        %364 = sbr.rel (%p361) target = $region64
      $region63: #{tpu_custom_call.1} parent=5 // pred_region
        %s365 = ssub.s32 %s22, 1
        // Predicated region
        $region65: #{tpu_custom_call.1} parent=63 // pred_check
          %p366 = pneg %p116
        $region66: #{tpu_custom_call.1} parent=63 // pred_check_branch
          %368 = sbr.rel (%p366) target = $region68
        $region67: #{tpu_custom_call.1} parent=63 // pred_region
          %369 = dma.done [#allocation4], 256
        $region68: #{tpu_custom_call.1} parent=63 // pred_fallthru
          _
        %p370 = pneg %p43
        %p371 = pneg %p40
        %p372 = scmp.lt.s32.totalorder %s27, 1
        %s373 = scalar_select %p372, %s27, 1
        %s374 = smul.addr %s373, 8
        %s375 = scalar_lea.vmem %s1, %s374
        %p376 = pneg %p69
        %p377 = pneg %p66
        %p378 = scmp.lt.s32.totalorder %s27, 1
        %s379 = scalar_select %p378, %s27, 1
        %s380 = smul.addr %s379, 8
        %s381 = scalar_lea.vmem %s2, %s380
        %p382 = pneg %p95
        %p383 = pneg %p92
        %p384 = pneg %p116
        %p385 = pneg %p113
        %p386 = pneg %p137
        %p387 = pneg %p134
        %p388 = pneg %p158
        %p389 = pneg %p155
        %p390 = pneg %p179
        %p391 = pneg %p176
        %p392 = pneg %p200
        %p393 = pneg %p197
        %p394 = pneg %p221
        %p395 = pneg %p218
        %p396 = pneg %p242
        %p397 = pneg %p239
        %p398 = pneg %p263
        %p399 = pneg %p260
        %p400 = pneg %p289
        %p401 = pneg %p286
        %s402 = sand.u32 %s276, 1
        %s403 = scalar_lea.sflag [#allocation5], %s402
        %s404 = sand.u32 %s276, 1
        %s405 = smul.addr %s404, 8
        %s406 = scalar_lea.vmem [#allocation6], %s405
        %p407 = scmp.lt.s32.totalorder %s27, 1
        %s408 = scalar_select %p407, %s27, 1
        %s409 = smul.addr %s408, 8
        %s410 = scalar_lea.vmem %s1, %s409
        %p411 = scmp.lt.s32.totalorder %s27, 1
        %s412 = scalar_select %p411, %s27, 1
        %s413 = smul.addr %s412, 8
        %s414 = scalar_lea.vmem %s2, %s413
        %s415 = sld [smem:[#allocation2]]
        %v416 = vld [vmem:[%s410] sm:$0xff]
        %v417 = vld [vmem:[%s414] sm:$0xff]
        %v418 = vld [vmem:[#allocation3] sm:$0xff]
        %v419 = vld [vmem:[#allocation3 + $0x8] sm:$0xff]
        %v420 = vld [vmem:[%s4] sm:$0x1]
        %v422 = vlaneseq
        %v423 = vshrl.u32 %v422, 7
        %v424 = vsub.s32 0, %v423
        %v425 = vrot.slane %v420, %v424
        %vm427 = vcmask 130048
        %v429 = vsel %vm427, %v416, 0
        %431 = vmatprep.subr.mxu0 0.0
        %432 = vmatpush1.msra.mxu0 0.0
        %433 = vmatprep.subr.mxu0 0.0
        %434 = vmatpush1.msra.mxu0 0.0
        %435 = vmatprep.subr.mxu0 0.0
        %436 = vmatpush1.msra.mxu0 0.0
        %437 = vmatprep.subr.mxu0 0.0
        %438 = vmatpush1.msra.mxu0 0.0
        %439 = vmatprep.subr.mxu0 0.0
        %440 = vmatpush1.msra.mxu0 0.0
        %441 = vmatprep.subr.mxu0 0.0
        %442 = vmatpush1.msra.mxu0 0.0
        %443 = vmatprep.subr.mxu0 0.0
        %444 = vmatpush1.msra.mxu0 0.0
        %445 = vmatprep.subr.mxu0 0.0
        %446 = vmatpush1.msra.mxu0 0.0
        %447 = vmatprep.subr.mxu0 0.0
        %448 = vmatpush1.msra.mxu0 0.0
        %449 = vmatprep.subr.mxu0 0.0
        %450 = vmatpush1.msra.mxu0 0.0
        %451 = vmatprep.subr.mxu0 0.0
        %452 = vmatpush1.msra.mxu0 0.0
        %453 = vmatprep.subr.mxu0 0.0
        %454 = vmatpush1.msra.mxu0 0.0
        %455 = vmatprep.subr.mxu0 0.0
        %456 = vmatpush1.msra.mxu0 0.0
        %457 = vmatprep.subr.mxu0 0.0
        %458 = vmatpush1.msra.mxu0 0.0
        %459 = vmatprep.subr.mxu0 0.0
        %460 = vmatpush1.msra.mxu0 %v419
        %461 = vmatprep.subr.mxu0 0.0
        %462 = vmatpush1.msra.mxu0 %v418
        %463 = vmatprep.subr.mxu0 0.0
        %464 = vmatpush2.msra.mxu0 0.0
        %465 = vmatprep.subr.mxu0 0.0
        %466 = vmatpush2.msra.mxu0 0.0
        %467 = vmatprep.subr.mxu0 0.0
        %468 = vmatpush2.msra.mxu0 0.0
        %469 = vmatprep.subr.mxu0 0.0
        %470 = vmatpush2.msra.mxu0 0.0
        %471 = vmatprep.subr.mxu0 0.0
        %472 = vmatpush2.msra.mxu0 0.0
        %473 = vmatprep.subr.mxu0 0.0
        %474 = vmatpush2.msra.mxu0 0.0
        %475 = vmatprep.subr.mxu0 0.0
        %476 = vmatpush2.msra.mxu0 0.0
        %477 = vmatprep.subr.mxu0 0.0
        %478 = vmatpush2.msra.mxu0 0.0
        %479 = vmatprep.subr.mxu0 0.0
        %480 = vmatpush2.msra.mxu0 0.0
        %481 = vmatprep.subr.mxu0 0.0
        %482 = vmatpush2.msra.mxu0 0.0
        %483 = vmatprep.subr.mxu0 0.0
        %484 = vmatpush2.msra.mxu0 0.0
        %485 = vmatprep.subr.mxu0 0.0
        %486 = vmatpush2.msra.mxu0 0.0
        %487 = vmatprep.subr.mxu0 0.0
        %488 = vmatpush2.msra.mxu0 0.0
        %489 = vmatprep.subr.mxu0 0.0
        %490 = vmatpush2.msra.mxu0 0.0
        %491 = vmatprep.subr.mxu0 0.0
        %492 = vmatpush2.msra.mxu0 0.0
        %493 = vmatprep.subr.mxu0 0.0
        %494 = vmatpush2.msra.mxu0 0.0
        %495 = vmatprep.mubr.f32.mxu0 0.0
        %496 = vmatmul.mubr.f32.gmra.mxu0 %v429
        %v497 = vpop.f32.mrf.mxu0
        %v498 = vadd.f32 %v425, %v497
        %v499 = vpop.f32.mrf.mxu0
        %500 = vdwg.mxu0
        %v501 = vmax.f32 %v498, 0.0
        %v502 = vand.u32 2147483647, %v498
        %v503 = vsub.f32 0.0, %v502
        %v504 = vmul.f32 %v503, 1.442695
        %v505 = vpow.pop %v504
        %v506 = vadd.f32 %v505, 1.0
        %v507 = vlog2.pop %v506
        %v508 = vmul.f32 %v507, 0.6931472
        %v509 = vmul.f32 -0.5, %v505
        %v510 = vadd.f32 %v509, 1.0
        %v511 = vmul.f32 %v510, %v505
        %v512 = vand.u32 2147483647, %v505
        %vm513 = vcmp.lt.f32.partialorder %v512, 0.0004427343
        %v514 = vsel %vm513, %v511, %v508
        %v515 = vadd.f32 %v501, %v514
        %v516 = vadd.f32 %v515, 1e-06
        %v517 = vrsqrt.pop %v516
        %v518 = vmul.f32 %v516, %v517
        %vm519 = vcmp.eq.f32.partialorder %v516, inf
        %v520 = vsel %vm519, %v516, %v518
        %vm521 = vcmp.eq.f32.partialorder %v516, 0.0
        %v522 = vand.u32 %v516, 2147483648
        %v523 = vsel %vm521, %v522, %v520
        %525 = vrot.lane.b32.xlu0 %v417, 8
        %v526 = vpop.permute.xlu0 %525
        %v528 = vmul.f32 %v523, %v526
        %530 = vrot.lane.b32.xlu0 %v528, 120
        %v531 = vpop.permute.xlu0 %530
        %v533 = vadd.f32 %v498, %v531
        %v534 = vlog2.pop %v516
        %v535 = vmul.f32 %v534, 0.6931472
        %537 = vrot.lane.b32.xlu0 %v535, 120
        %v538 = vpop.permute.xlu0 %537
        %vm540 = vcmask 64512
        %v541 = vsel %vm540, %v538, 0.0
        %542 = vadd.xlane.f32.xlu0 %v541
        %v543 = vpop.xlane.xlu0 %542
        %v544 = vrot.slane %v543, 4
        %v545 = vadd.f32 %v543, %v544
        %v546 = vrot.slane %v545, 2
        %v547 = vadd.f32 %v545, %v546
        %v548 = vrot.slane %v547, 1
        %v549 = vadd.f32 %v547, %v548
        %s550 = vtos %v549
        %s551 = sadd.f32 %s550, 117.62413
        %v552 = vmul.f32 %v417, %v417
        %v553 = vsel %vm540, %v552, 0.0
        %554 = vadd.xlane.f32.xlu0 %v553
        %v555 = vpop.xlane.xlu0 %554
        %v556 = vrot.slane %v555, 4
        %v557 = vadd.f32 %v555, %v556
        %v558 = vrot.slane %v557, 2
        %v559 = vadd.f32 %v557, %v558
        %v560 = vrot.slane %v559, 1
        %v561 = vadd.f32 %v559, %v560
        %s562 = vtos %v561
        %s563 = sadd.f32 %s551, %s562
        %s564 = smul.f32 %s563, -0.5
        %v565 = vld [vmem:[%s5] sm:$0xff]
        %v566 = vld [vmem:[%s6] sm:$0x1]
        %v568 = vlaneseq
        %v569 = vshrl.u32 %v568, 7
        %v570 = vsub.s32 0, %v569
        %v571 = vrot.slane %v566, %v570
        %v574 = vsel %vm540, %v533, 0
        %576 = vmatprep.subr.mxu0 0.0
        %577 = vmatpush1.msra.mxu0 0.0
        %578 = vmatprep.subr.mxu0 0.0
        %579 = vmatpush1.msra.mxu0 0.0
        %580 = vmatprep.subr.mxu0 0.0
        %581 = vmatpush1.msra.mxu0 0.0
        %582 = vmatprep.subr.mxu0 0.0
        %583 = vmatpush1.msra.mxu0 0.0
        %584 = vmatprep.subr.mxu0 0.0
        %585 = vmatpush1.msra.mxu0 0.0
        %586 = vmatprep.subr.mxu0 0.0
        %587 = vmatpush1.msra.mxu0 0.0
        %588 = vmatprep.subr.mxu0 0.0
        %589 = vmatpush1.msra.mxu0 0.0
        %590 = vmatprep.subr.mxu0 0.0
        %591 = vmatpush1.msra.mxu0 0.0
        %592 = vmatprep.subr.mxu0 0.0
        %593 = vmatpush1.msra.mxu0 0.0
        %594 = vmatprep.subr.mxu0 0.0
        %595 = vmatpush1.msra.mxu0 0.0
        %596 = vmatprep.subr.mxu0 0.0
        %597 = vmatpush1.msra.mxu0 0.0
        %598 = vmatprep.subr.mxu0 0.0
        %599 = vmatpush1.msra.mxu0 0.0
        %600 = vmatprep.subr.mxu0 0.0
        %601 = vmatpush1.msra.mxu0 0.0
        %602 = vmatprep.subr.mxu0 0.0
        %603 = vmatpush1.msra.mxu0 0.0
        %604 = vmatprep.subr.mxu0 0.0
        %605 = vmatpush1.msra.mxu0 0.0
        %606 = vmatprep.subr.mxu0 0.0
        %607 = vmatpush1.msra.mxu0 %v565
        %608 = vmatprep.subr.mxu0 0.0
        %609 = vmatpush2.msra.mxu0 0.0
        %610 = vmatprep.subr.mxu0 0.0
        %611 = vmatpush2.msra.mxu0 0.0
        %612 = vmatprep.subr.mxu0 0.0
        %613 = vmatpush2.msra.mxu0 0.0
        %614 = vmatprep.subr.mxu0 0.0
        %615 = vmatpush2.msra.mxu0 0.0
        %616 = vmatprep.subr.mxu0 0.0
        %617 = vmatpush2.msra.mxu0 0.0
        %618 = vmatprep.subr.mxu0 0.0
        %619 = vmatpush2.msra.mxu0 0.0
        %620 = vmatprep.subr.mxu0 0.0
        %621 = vmatpush2.msra.mxu0 0.0
        %622 = vmatprep.subr.mxu0 0.0
        %623 = vmatpush2.msra.mxu0 0.0
        %624 = vmatprep.subr.mxu0 0.0
        %625 = vmatpush2.msra.mxu0 0.0
        %626 = vmatprep.subr.mxu0 0.0
        %627 = vmatpush2.msra.mxu0 0.0
        %628 = vmatprep.subr.mxu0 0.0
        %629 = vmatpush2.msra.mxu0 0.0
        %630 = vmatprep.subr.mxu0 0.0
        %631 = vmatpush2.msra.mxu0 0.0
        %632 = vmatprep.subr.mxu0 0.0
        %633 = vmatpush2.msra.mxu0 0.0
        %634 = vmatprep.subr.mxu0 0.0
        %635 = vmatpush2.msra.mxu0 0.0
        %636 = vmatprep.subr.mxu0 0.0
        %637 = vmatpush2.msra.mxu0 0.0
        %638 = vmatprep.subr.mxu0 0.0
        %639 = vmatpush2.msra.mxu0 0.0
        %640 = vmatprep.mubr.f32.mxu0 0.0
        %641 = vmatmul.mubr.f32.gmra.mxu0 %v574
        %v642 = vpop.f32.mrf.mxu0
        %v643 = vadd.f32 %v571, %v642
        %v644 = vpop.f32.mrf.mxu0
        %645 = vdwg.mxu0
        %v646 = vtanh.pop %v643
        %v647 = vld [vmem:[%s7] sm:$0xff]
        %v648 = vld [vmem:[%s7 + $0x8] sm:$0xff]
        %v649 = vld [vmem:[%s7 + $0x10] sm:$0xff]
        %v650 = vld [vmem:[%s7 + $0x18] sm:$0xff]
        %v651 = vld [vmem:[%s8] sm:$0x1]
        %v653 = vlaneseq
        %v654 = vshrl.u32 %v653, 7
        %v655 = vsub.s32 0, %v654
        %v656 = vrot.slane %v651, %v655
        %659 = vrot.lane.b32.xlu0 %v646, 112
        %v660 = vpop.permute.xlu0 %659
        %vm661 = vcmask 261120
        %v662 = vsel %vm661, %v660, 0
        %664 = vmatprep.subr.mxu0 0.0
        %665 = vmatpush1.msra.mxu0 0.0
        %666 = vmatprep.subr.mxu0 0.0
        %667 = vmatpush1.msra.mxu0 0.0
        %668 = vmatprep.subr.mxu0 0.0
        %669 = vmatpush1.msra.mxu0 0.0
        %670 = vmatprep.subr.mxu0 0.0
        %671 = vmatpush1.msra.mxu0 0.0
        %672 = vmatprep.subr.mxu0 0.0
        %673 = vmatpush1.msra.mxu0 0.0
        %674 = vmatprep.subr.mxu0 0.0
        %675 = vmatpush1.msra.mxu0 0.0
        %676 = vmatprep.subr.mxu0 0.0
        %677 = vmatpush1.msra.mxu0 0.0
        %678 = vmatprep.subr.mxu0 0.0
        %679 = vmatpush1.msra.mxu0 0.0
        %680 = vmatprep.subr.mxu0 0.0
        %681 = vmatpush1.msra.mxu0 0.0
        %682 = vmatprep.subr.mxu0 0.0
        %683 = vmatpush1.msra.mxu0 0.0
        %684 = vmatprep.subr.mxu0 0.0
        %685 = vmatpush1.msra.mxu0 0.0
        %686 = vmatprep.subr.mxu0 0.0
        %687 = vmatpush1.msra.mxu0 0.0
        %688 = vmatprep.subr.mxu0 0.0
        %689 = vmatpush1.msra.mxu0 %v650
        %690 = vmatprep.subr.mxu0 0.0
        %691 = vmatpush1.msra.mxu0 %v649
        %692 = vmatprep.subr.mxu0 0.0
        %693 = vmatpush1.msra.mxu0 %v648
        %694 = vmatprep.subr.mxu0 0.0
        %695 = vmatpush1.msra.mxu0 %v647
        %696 = vmatprep.subr.mxu0 0.0
        %697 = vmatpush2.msra.mxu0 0.0
        %698 = vmatprep.subr.mxu0 0.0
        %699 = vmatpush2.msra.mxu0 0.0
        %700 = vmatprep.subr.mxu0 0.0
        %701 = vmatpush2.msra.mxu0 0.0
        %702 = vmatprep.subr.mxu0 0.0
        %703 = vmatpush2.msra.mxu0 0.0
        %704 = vmatprep.subr.mxu0 0.0
        %705 = vmatpush2.msra.mxu0 0.0
        %706 = vmatprep.subr.mxu0 0.0
        %707 = vmatpush2.msra.mxu0 0.0
        %708 = vmatprep.subr.mxu0 0.0
        %709 = vmatpush2.msra.mxu0 0.0
        %710 = vmatprep.subr.mxu0 0.0
        %711 = vmatpush2.msra.mxu0 0.0
        %712 = vmatprep.subr.mxu0 0.0
        %713 = vmatpush2.msra.mxu0 0.0
        %714 = vmatprep.subr.mxu0 0.0
        %715 = vmatpush2.msra.mxu0 0.0
        %716 = vmatprep.subr.mxu0 0.0
        %717 = vmatpush2.msra.mxu0 0.0
        %718 = vmatprep.subr.mxu0 0.0
        %719 = vmatpush2.msra.mxu0 0.0
        %720 = vmatprep.subr.mxu0 0.0
        %721 = vmatpush2.msra.mxu0 0.0
        %722 = vmatprep.subr.mxu0 0.0
        %723 = vmatpush2.msra.mxu0 0.0
        %724 = vmatprep.subr.mxu0 0.0
        %725 = vmatpush2.msra.mxu0 0.0
        %726 = vmatprep.subr.mxu0 0.0
        %727 = vmatpush2.msra.mxu0 0.0
        %728 = vmatprep.mubr.f32.mxu0 0.0
        %729 = vmatmul.mubr.f32.gmra.mxu0 %v662
        %v730 = vpop.f32.mrf.mxu0
        %v731 = vadd.f32 %v656, %v730
        %v732 = vpop.f32.mrf.mxu0
        %733 = vdwg.mxu0
        %v734 = vld [vmem:[%s9] sm:$0x1]
        %v735 = vmax.f32 %v734, 0.0
        %v736 = vand.u32 2147483647, %v734
        %v737 = vsub.f32 0.0, %v736
        %v738 = vmul.f32 %v737, 1.442695
        %v739 = vpow.pop %v738
        %v740 = vadd.f32 %v739, 1.0
        %v741 = vlog2.pop %v740
        %v742 = vmul.f32 %v741, 0.6931472
        %v743 = vmul.f32 -0.5, %v739
        %v744 = vadd.f32 %v743, 1.0
        %v745 = vmul.f32 %v744, %v739
        %v746 = vand.u32 2147483647, %v739
        %vm747 = vcmp.lt.f32.partialorder %v746, 0.0004427343
        %v748 = vsel %vm747, %v745, %v742
        %v749 = vadd.f32 %v735, %v748
        %v750 = vadd.f32 %v749, 1e-06
        %v751 = vrcp.pop %v750
        %v752 = vlog2.pop %v750
        %v753 = vmul.f32 %v752, 0.6931472
        %vm754 = vcmask 57344
        %v755 = vsel %vm754, %v753, 0.0
        %756 = vadd.xlane.f32.xlu0 %v755
        %v757 = vpop.xlane.xlu0 %756
        %v758 = vrot.slane %v757, 4
        %v759 = vadd.f32 %v757, %v758
        %v760 = vrot.slane %v759, 2
        %v761 = vadd.f32 %v759, %v760
        %v762 = vrot.slane %v761, 1
        %v763 = vadd.f32 %v761, %v762
        %s764 = vtos %v763
        %v765 = vrot.slane %v533, 1
        %v766 = vsub.f32 %v765, %v731
        %v767 = vlaneseq
        %v768 = vshrl.u32 %v767, 7
        %vm769 = vcmp.lt.s32.totalorder %v768, 7
        %v770 = vmul.f32 %v766, %v766
        %v772 = vlaneseq
        %v773 = vshrl.u32 %v772, 7
        %v774 = vsub.s32 0, %v773
        %v775 = vrot.slane %v751, %v774
        %v777 = vmul.f32 %v770, %v775
        %v778 = vsel %vm769, %v777, 0.0
        %v779 = vsel %vm540, %v778, 0.0
        %780 = vadd.xlane.f32.xlu0 %v779
        %v781 = vpop.xlane.xlu0 %780
        %v782 = vrot.slane %v781, 4
        %v783 = vadd.f32 %v781, %v782
        %v784 = vrot.slane %v783, 2
        %v785 = vadd.f32 %v783, %v784
        %v786 = vrot.slane %v785, 1
        %v787 = vadd.f32 %v785, %v786
        %s788 = vtos %v787
        %s789 = sadd.f32 %s764, 14.703016
        %s790 = smul.f32 %s789, 7.0
        %s791 = sadd.f32 %s790, %s788
        %s792 = smul.f32 %s791, -0.5
        %v793 = vld [vmem:[%s10] sm:$0x1]
        %v794 = vmax.f32 %v793, 0.0
        %v795 = vand.u32 2147483647, %v793
        %v796 = vsub.f32 0.0, %v795
        %v797 = vmul.f32 %v796, 1.442695
        %v798 = vpow.pop %v797
        %v799 = vadd.f32 %v798, 1.0
        %v800 = vlog2.pop %v799
        %v801 = vmul.f32 %v800, 0.6931472
        %v802 = vmul.f32 -0.5, %v798
        %v803 = vadd.f32 %v802, 1.0
        %v804 = vmul.f32 %v803, %v798
        %v805 = vand.u32 2147483647, %v798
        %vm806 = vcmp.lt.f32.partialorder %v805, 0.0004427343
        %v807 = vsel %vm806, %v804, %v801
        %v808 = vadd.f32 %v794, %v807
        %v809 = vadd.f32 %v808, 1e-06
        %v810 = vrcp.pop %v809
        %v811 = vlog2.pop %v809
        %v812 = vmul.f32 %v811, 0.6931472
        %vm813 = vcmask 122880
        %v814 = vsel %vm813, %v812, 0.0
        %815 = vadd.xlane.f32.xlu0 %v814
        %v816 = vpop.xlane.xlu0 %815
        %v817 = vrot.slane %v816, 4
        %v818 = vadd.f32 %v816, %v817
        %v819 = vrot.slane %v818, 2
        %v820 = vadd.f32 %v818, %v819
        %v821 = vrot.slane %v820, 1
        %v822 = vadd.f32 %v820, %v821
        %s823 = vtos %v822
        %v824 = vsub.f32 %v416, %v643
        %v825 = vmul.f32 %v824, %v824
        %v827 = vlaneseq
        %v828 = vshrl.u32 %v827, 7
        %v829 = vsub.s32 0, %v828
        %v830 = vrot.slane %v810, %v829
        %v832 = vmul.f32 %v825, %v830
        %v833 = vsel %vm427, %v832, 0.0
        %834 = vadd.xlane.f32.xlu0 %v833
        %v835 = vpop.xlane.xlu0 %834
        %v836 = vrot.slane %v835, 4
        %v837 = vadd.f32 %v835, %v836
        %v838 = vrot.slane %v837, 2
        %v839 = vadd.f32 %v837, %v838
        %v840 = vrot.slane %v839, 1
        %v841 = vadd.f32 %v839, %v840
        %s842 = vtos %v841
        %s843 = sadd.f32 %s823, 29.406033
        %s844 = smul.f32 %s843, 8.0
        %s845 = sadd.f32 %s844, %s842
        %s846 = smul.f32 %s845, -0.5
        %s847 = ssub.f32 %s792, %s564
        %s848 = smul.f32 %s415, %s847
        %s849 = sadd.f32 %s846, %s848
        %v850 = vstv %s849
        %851 = vst [vmem:[%s406] sm:$0xff] %v850
        %s852 = sand.u32 %s276, 1
        %s853 = scalar_lea.sflag [#allocation5], %s852
        %s854 = sand.u32 %s276, 1
        %s855 = smul.addr %s854, 8
        %s856 = scalar_lea.vmem [#allocation6], %s855
        // Predicated region
        $region69: #{tpu_custom_call.1} parent=63 // pred_check
          %p857 = pneg %p286
        $region70: #{tpu_custom_call.1} parent=63 // pred_check_branch
          %859 = sbr.rel (%p857) target = $region72
        $region71: #{tpu_custom_call.1} parent=63 // pred_region
          %s861 = ssub.s32 128, 128
          %862 = vsyncadd %s853, %s861
          %s863 = smul.addr %s27, 128
          %s864 = scalar_lea.hbm %s11, %s863
          %s866 = sshll.u32 %s856, 4
          %s867 = int_to_ptr.vmem [resolvable:$true] %s866
          %869 = dma.vmem_to_hbm [thread:$0]  %s867, 128, %s864, %s853
        $region72: #{tpu_custom_call.1} parent=63 // pred_fallthru
          _
      $region64: #{tpu_custom_call.1} parent=5 // pred_fallthru
        _
      %p870 = scmp.le.s32.totalorder 2, %s22
      // Predicated region
      $region73: #{tpu_custom_call.1} parent=5 // pred_check
        %p871 = pneg %p870
      $region74: #{tpu_custom_call.1} parent=5 // pred_check_branch
        %873 = sbr.rel (%p871) target = $region76
      $region75: #{tpu_custom_call.1} parent=5 // pred_region
        %s874 = ssub.s32 %s22, 2
        // Predicated region
        $region77: #{tpu_custom_call.1} parent=75 // pred_check
          %p875 = pneg %p292
        $region78: #{tpu_custom_call.1} parent=75 // pred_check_branch
          %877 = sbr.rel (%p875) target = $region80
        $region79: #{tpu_custom_call.1} parent=75 // pred_region
          %s878 = sand.u32 %s277, 1
          %s879 = scalar_lea.sflag [#allocation5], %s878
          %s880 = sand.u32 %s277, 1
          %s881 = smul.addr %s880, 8
          %s882 = scalar_lea.vmem [#allocation6], %s881
          %883 = dma.done %s879, 128
        $region80: #{tpu_custom_call.1} parent=75 // pred_fallthru
          _
      $region76: #{tpu_custom_call.1} parent=5 // pred_fallthru
        _
    $region6: #{tpu_custom_call.1} parent=1 // loop_footer
      %s26 = sadd.s32 1, %s22
    $region7: #{tpu_custom_call.1} parent=1 // loop_footer_branch
      %21 = sbr.rel target = $region3
    $region8: #{tpu_custom_call.1} parent=1 // loop_exit
      _
    %884 = vsyncpa [#allocation4], 1
    %s885 = scalar_lea.sflag [#allocation4], 1
    %886 = vsyncpa %s885, 1
    %887 = vsyncpa [#allocation5], 1
    %s888 = scalar_lea.sflag [#allocation5], 1
    %889 = vsyncpa %s888, 1

</llo_original>
